<compile_context>
chip_gen: v7x
topology: tpu7x:2x2x1
jax: 0.10.0
libtpu: 0.0.40
codegen_flags: <defaults>
</compile_context>

<pallas_src>
import jax
import jax.numpy as jnp
import numpy as np
from jax.experimental import pallas as pl
from jax.experimental.pallas import tpu as pltpu  # noqa: F401  (TPU backend)


# ----------------------------------------------------------------------------
# Fused Pallas kernel: conv(+bias) -> relu1 -> fc(+bias) -> relu2
# ----------------------------------------------------------------------------
def _fused_forward_kernel(p3_ref, w2d_ref, cb_ref, fcw_ref, fcb_ref,
                          conv_ref, relu1_ref, fc_ref, relu2_ref):
    # Shapes for the shipped config:
    #   p3_ref   : (N, Cin*KH*KW, OH*OW) = (2, 36, 196)   im2col patches (f32)
    #   w2d_ref  : (Cout, Cin*KH*KW)     = (8, 36)        (f32)
    #   cb_ref   : (Cout, 1)             = (8, 1)         (f32)
    #   fcw_ref  : (Cout, fc_out, OH*OW) = (8, 32, 196)   fc weight, channel-major (bf16)
    #   fcb_ref  : (1, fc_out)           = (1, 32)        (f32)
    #   conv_ref, relu1_ref : (N, Cout, OH*OW)            lane-dense (196 lanes), f32
    #   fc_ref, relu2_ref   : (N, fc_out)                 f32
    n_batch, n_chan, _ = conv_ref.shape

    w2d = w2d_ref[...]                                    # (Cout, K)
    cb = cb_ref[...]                                      # (Cout, 1)

    # --- conv (+bias) and relu1: one tiny MXU matmul per sample (N=2), so the
    # results land directly in (N, Cout, OH*OW) layout == contiguous NCHW
    # flatten (free reshape outside, and the layout the fc layer consumes).
    for n in range(n_batch):
        conv_n = jnp.dot(w2d, p3_ref[n], preferred_element_type=jnp.float32) + cb
        conv_ref[n] = conv_n.astype(conv_ref.dtype)
        relu1_ref[n] = jnp.maximum(conv_n, 0.0).astype(relu1_ref.dtype)

    # --- fc (+bias) and relu2: ONE channel-batched MXU contraction replacing
    # the previous 8-iteration per-channel loop (8 serialized matmuls + add
    # chain + 16 sublane-strided slices).  The (Cout, N, P) operand is built
    # from per-channel (N, P) slices; [None] / axis-0 concat only touch the
    # untiled leading dim (vreg-group bookkeeping, no lane/sublane movement).
    relu1_cnp = jnp.concatenate(
        [relu1_ref[:, c, :][None] for c in range(n_chan)], axis=0)  # (Cout, N, P)

    fc_c = jax.lax.dot_general(
        relu1_cnp.astype(fcw_ref.dtype),                  # bf16 MXU operand
        fcw_ref[...],                                     # (Cout, fc_out, P) bf16
        dimension_numbers=(((2,), (2,)), ((0,), (0,))),   # batch Cout, contract P
        preferred_element_type=jnp.float32)               # (Cout, N, fc_out) f32
    fc_pre = jnp.sum(fc_c, axis=0) + fcb_ref[...]         # (N, fc_out) + (1, fc_out)
    fc_ref[...] = fc_pre.astype(fc_ref.dtype)
    relu2_ref[...] = jnp.maximum(fc_pre, 0.0).astype(relu2_ref.dtype)


# ----------------------------------------------------------------------------
# FeatureExtractor forward (wrapper: im2col glue + free reshapes + one kernel)
# ----------------------------------------------------------------------------
def feature_extractor_forward(x, params):
    """Replicates FeatureExtractor.forward: returns a dict of all activations."""
    conv_w, conv_b = params["conv_w"], params["conv_b"]
    fc_w, fc_b = params["fc_w"], params["fc_b"]

    Nb, Cin, H, W = x.shape
    Cout, _, KH, KW = conv_w.shape
    OH, OW = H - KH + 1, W - KW + 1
    P = OH * OW
    K = Cin * KH * KW
    fc_out, fc_in = fc_w.shape
    assert fc_in == Cout * P, "fc.in_features must match flattened conv output"

    # im2col glue on the tiny (8 KB) input; k = cin*KH*KW + kh*KW + kw matches
    # conv_w.reshape(Cout, -1) flattening. (Kept wrapper-side per review: it is
    # a co-equal, launch-bound cost; all hot work is inside the fused kernel.)
    patches = jnp.stack(
        [x[:, :, kh:kh + OH, kw:kw + OW] for kh in range(KH) for kw in range(KW)],
        axis=2,
    )                                               # (Nb, Cin, KH*KW, OH, OW)
    p3 = patches.reshape(Nb, K, P)                  # (Nb, K, P)

    w2d = conv_w.reshape(Cout, K)                   # free reshape
    cb2 = conv_b.reshape(Cout, 1)                   # free reshape
    # fc weight re-laid out channel-major (Cout, fc_out, P) and pre-cast to
    # bf16 wrapper-side: halves the DMA/VMEM of the largest operand and makes
    # the in-kernel fc a single batched contraction with no strided slices.
    fcw = fc_w.reshape(fc_out, Cout, P).transpose(1, 0, 2).astype(jnp.bfloat16)
    fcb2 = fc_b.reshape(1, fc_out)                  # free reshape

    # Advisory cost estimate (kernel is launch/latency bound at this size).
    flops = 2 * Nb * Cout * K * P + 2 * Nb * fc_out * Cout * P
    bytes_accessed = (
        Nb * K * P * 4 + Cout * K * 4 + Cout * 4 +          # p3, w2d, cb
        Cout * fc_out * P * 2 + fc_out * 4 +                 # fcw (bf16), fcb
        2 * Nb * Cout * P * 4 + 2 * Nb * fc_out * 4)         # conv, relu1, fc, relu2
    cost = pl.CostEstimate(flops=flops, transcendentals=0,
                           bytes_accessed=bytes_accessed)

    conv3, relu1_3, fc_pre, relu2 = pl.pallas_call(
        _fused_forward_kernel,
        out_shape=(
            jax.ShapeDtypeStruct((Nb, Cout, P), jnp.float32),
            jax.ShapeDtypeStruct((Nb, Cout, P), jnp.float32),
            jax.ShapeDtypeStruct((Nb, fc_out), jnp.float32),
            jax.ShapeDtypeStruct((Nb, fc_out), jnp.float32),
        ),
        in_specs=[
            pl.BlockSpec((Nb, K, P), lambda: (0, 0, 0)),        # im2col patches
            pl.BlockSpec((Cout, K), lambda: (0, 0)),            # conv weight 2-D
            pl.BlockSpec((Cout, 1), lambda: (0, 0)),            # conv bias
            pl.BlockSpec((Cout, fc_out, P), lambda: (0, 0, 0)), # fc weight, ch-major
            pl.BlockSpec((1, fc_out), lambda: (0, 0)),          # fc bias
        ],
        out_specs=(
            pl.BlockSpec((Nb, Cout, P), lambda: (0, 0, 0)),
            pl.BlockSpec((Nb, Cout, P), lambda: (0, 0, 0)),
            pl.BlockSpec((Nb, fc_out), lambda: (0, 0)),
            pl.BlockSpec((Nb, fc_out), lambda: (0, 0)),
        ),
        cost_estimate=cost,
    )(p3, w2d, cb2, fcw, fcb2)

    return {
        "input": x,
        "conv": conv3.reshape(Nb, Cout, OH, OW),    # free: (N,C,P) == NCHW flatten
        "relu1": relu1_3.reshape(Nb, Cout, OH, OW),
        "fc": fc_pre,
        "relu2": relu2,
    }


# ----------------------------------------------------------------------------
# Deterministic params, NumPy reference (PyTorch semantics), driver
# ----------------------------------------------------------------------------
def init_params(key):
    Cin, Cout, Ksz = 4, 8, 3
    OH = OW = 16 - Ksz + 1  # 14
    fc_in, fc_out = Cout * OH * OW, 32
    k1, k2, k3, k4 = jax.random.split(key, 4)
    return {
        "conv_w": 0.1 * jax.random.normal(k1, (Cout, Cin, Ksz, Ksz), jnp.float32),
        "conv_b": 0.1 * jax.random.normal(k2, (Cout,), jnp.float32),
        "fc_w": 0.05 * jax.random.normal(k3, (fc_out, fc_in), jnp.float32),
        "fc_b": 0.05 * jax.random.normal(k4, (fc_out,), jnp.float32),
    }


def _reference_forward_np(x, params):
    """Plain NumPy replica of the PyTorch module graph (for value checking)."""
    xn = np.asarray(x, dtype=np.float64)
    cw = np.asarray(params["conv_w"], dtype=np.float64)
    cb = np.asarray(params["conv_b"], dtype=np.float64)
    fw = np.asarray(params["fc_w"], dtype=np.float64)
    fb = np.asarray(params["fc_b"], dtype=np.float64)
    Nb, Cin, H, W = xn.shape
    Cout, _, KH, KW = cw.shape
    OH, OW = H - KH + 1, W - KW + 1
    patches = np.stack(
        [xn[:, :, kh:kh + OH, kw:kw + OW] for kh in range(KH) for kw in range(KW)],
        axis=2,
    ).reshape(Nb, Cin * KH * KW, OH * OW)
    conv = np.einsum("ck,nkp->ncp", cw.reshape(Cout, -1), patches) + cb[None, :, None]
    conv = conv.reshape(Nb, Cout, OH, OW)
    relu1 = np.maximum(conv, 0.0)
    fc = relu1.reshape(Nb, -1) @ fw.T + fb
    relu2 = np.maximum(fc, 0.0)
    return {"conv": conv, "relu1": relu1, "fc": fc, "relu2": relu2}


if __name__ == "__main__":
    key = jax.random.PRNGKey(0)
    kx, kp = jax.random.split(key)
    x = jax.random.normal(kx, (2, 4, 16, 16), jnp.float32)  # NCHW
    params = init_params(kp)

    acts = jax.jit(feature_extractor_forward)(x, params)
    acts = jax.block_until_ready(acts)

    # shape checks implied by the module graph
    assert acts["input"].shape == (2, 4, 16, 16)
    assert acts["conv"].shape == (2, 8, 14, 14)
    assert acts["relu1"].shape == (2, 8, 14, 14)
    assert acts["fc"].shape == (2, 32)
    assert acts["relu2"].shape == (2, 32)

    # value checks against the NumPy reference of the PyTorch semantics
    ref = _reference_forward_np(x, params)
    for name in ("conv", "relu1", "fc", "relu2"):
        got = np.asarray(acts[name], dtype=np.float64)
        assert np.allclose(got, ref[name], rtol=5e-3, atol=5e-3), f"mismatch in {name}"

    print("KERNEL_OK")
</pallas_src>

<mosaic_0001>
module attributes {stable_mosaic.version = 11 : i64} {
  func.func @_fused_forward_kernel(%arg0: memref<2x36x196xf32, #tpu.memory_space<vmem>>, %arg1: memref<8x36xf32, #tpu.memory_space<vmem>>, %arg2: memref<8x1xf32, #tpu.memory_space<vmem>>, %arg3: memref<8x32x196xbf16, #tpu.memory_space<vmem>>, %arg4: memref<1x32xf32, #tpu.memory_space<vmem>>, %arg5: memref<2x8x196xf32, #tpu.memory_space<vmem>>, %arg6: memref<2x8x196xf32, #tpu.memory_space<vmem>>, %arg7: memref<2x32xf32, #tpu.memory_space<vmem>>, %arg8: memref<2x32xf32, #tpu.memory_space<vmem>>) attributes {dimension_semantics = [], scalar_prefetch = 0 : i64, scratch_operands = 0 : i64, tpu.core_type = #tpu.core_type<tc>} {
    %c0 = arith.constant 0 : index
    %c0_0 = arith.constant 0 : index
    %0 = vector.load %arg1[%c0, %c0_0] : memref<8x36xf32, #tpu.memory_space<vmem>>, vector<8x36xf32>
    %c0_1 = arith.constant 0 : index
    %c0_2 = arith.constant 0 : index
    %1 = vector.load %arg2[%c0_1, %c0_2] : memref<8x1xf32, #tpu.memory_space<vmem>>, vector<8x1xf32>
    %c0_3 = arith.constant 0 : index
    %c0_4 = arith.constant 0 : index
    %c0_5 = arith.constant 0 : index
    %2 = vector.load %arg0[%c0_3, %c0_4, %c0_5] : memref<2x36x196xf32, #tpu.memory_space<vmem>>, vector<1x36x196xf32>
    %3 = vector.shape_cast %2 : vector<1x36x196xf32> to vector<36x196xf32>
    %cst = arith.constant dense<0.000000e+00> : vector<8x196xf32>
    %4 = tpu.matmul %0, %3, %cst {dimension_numbers = #tpu.dot_dimension_numbers<[1], [0], [0], [1], [0, 0, 1, 1], [], []>} : vector<8x36xf32>, vector<36x196xf32>, vector<8x196xf32> -> vector<8x196xf32>
    %5 = vector.broadcast %1 : vector<8x1xf32> to vector<8x196xf32>
    %6 = arith.addf %4, %5 : vector<8x196xf32>
    %c0_6 = arith.constant 0 : index
    %c0_7 = arith.constant 0 : index
    %c0_8 = arith.constant 0 : index
    %7 = vector.load %arg5[%c0_6, %c0_7, %c0_8] : memref<2x8x196xf32, #tpu.memory_space<vmem>>, vector<1x8x196xf32>
    %8 = vector.shape_cast %7 : vector<1x8x196xf32> to vector<8x196xf32>
    %9 = vector.shape_cast %6 : vector<8x196xf32> to vector<1x8x196xf32>
    tpu.vector_store %arg5[%c0_6, %c0_7, %c0_8], %9 {strides = array<i32>} : memref<2x8x196xf32, #tpu.memory_space<vmem>>, vector<1x8x196xf32>,
    %cst_9 = arith.constant 0.000000e+00 : f32
    %10 = vector.broadcast %cst_9 : f32 to vector<8x196xf32>
    %11 = arith.maximumf %6, %10 : vector<8x196xf32>
    %c0_10 = arith.constant 0 : index
    %c0_11 = arith.constant 0 : index
    %c0_12 = arith.constant 0 : index
    %12 = vector.load %arg6[%c0_10, %c0_11, %c0_12] : memref<2x8x196xf32, #tpu.memory_space<vmem>>, vector<1x8x196xf32>
    %13 = vector.shape_cast %12 : vector<1x8x196xf32> to vector<8x196xf32>
    %14 = vector.shape_cast %11 : vector<8x196xf32> to vector<1x8x196xf32>
    tpu.vector_store %arg6[%c0_10, %c0_11, %c0_12], %14 {strides = array<i32>} : memref<2x8x196xf32, #tpu.memory_space<vmem>>, vector<1x8x196xf32>,
    %c1 = arith.constant 1 : index
    %c0_13 = arith.constant 0 : index
    %c0_14 = arith.constant 0 : index
    %15 = vector.load %arg0[%c1, %c0_13, %c0_14] : memref<2x36x196xf32, #tpu.memory_space<vmem>>, vector<1x36x196xf32>
    %16 = vector.shape_cast %15 : vector<1x36x196xf32> to vector<36x196xf32>
    %cst_15 = arith.constant dense<0.000000e+00> : vector<8x196xf32>
    %17 = tpu.matmul %0, %16, %cst_15 {dimension_numbers = #tpu.dot_dimension_numbers<[1], [0], [0], [1], [0, 0, 1, 1], [], []>} : vector<8x36xf32>, vector<36x196xf32>, vector<8x196xf32> -> vector<8x196xf32>
    %18 = vector.broadcast %1 : vector<8x1xf32> to vector<8x196xf32>
    %19 = arith.addf %17, %18 : vector<8x196xf32>
    %c1_16 = arith.constant 1 : index
    %c0_17 = arith.constant 0 : index
    %c0_18 = arith.constant 0 : index
    %20 = vector.load %arg5[%c1_16, %c0_17, %c0_18] : memref<2x8x196xf32, #tpu.memory_space<vmem>>, vector<1x8x196xf32>
    %21 = vector.shape_cast %20 : vector<1x8x196xf32> to vector<8x196xf32>
    %22 = vector.shape_cast %19 : vector<8x196xf32> to vector<1x8x196xf32>
    tpu.vector_store %arg5[%c1_16, %c0_17, %c0_18], %22 {strides = array<i32>} : memref<2x8x196xf32, #tpu.memory_space<vmem>>, vector<1x8x196xf32>,
    %cst_19 = arith.constant 0.000000e+00 : f32
    %23 = vector.broadcast %cst_19 : f32 to vector<8x196xf32>
    %24 = arith.maximumf %19, %23 : vector<8x196xf32>
    %c1_20 = arith.constant 1 : index
    %c0_21 = arith.constant 0 : index
    %c0_22 = arith.constant 0 : index
    %25 = vector.load %arg6[%c1_20, %c0_21, %c0_22] : memref<2x8x196xf32, #tpu.memory_space<vmem>>, vector<1x8x196xf32>
    %26 = vector.shape_cast %25 : vector<1x8x196xf32> to vector<8x196xf32>
    %27 = vector.shape_cast %24 : vector<8x196xf32> to vector<1x8x196xf32>
    tpu.vector_store %arg6[%c1_20, %c0_21, %c0_22], %27 {strides = array<i32>} : memref<2x8x196xf32, #tpu.memory_space<vmem>>, vector<1x8x196xf32>,
    %c0_23 = arith.constant 0 : index
    %c0_24 = arith.constant 0 : index
    %c0_25 = arith.constant 0 : index
    %28 = vector.load %arg6[%c0_23, %c0_24, %c0_25] : memref<2x8x196xf32, #tpu.memory_space<vmem>>, vector<2x1x196xf32>
    %29 = vector.shape_cast %28 : vector<2x1x196xf32> to vector<2x196xf32>
    %30 = vector.shape_cast %29 : vector<2x196xf32> to vector<1x2x196xf32>
    %c0_26 = arith.constant 0 : index
    %c1_27 = arith.constant 1 : index
    %c0_28 = arith.constant 0 : index
    %31 = vector.load %arg6[%c0_26, %c1_27, %c0_28] : memref<2x8x196xf32, #tpu.memory_space<vmem>>, vector<2x1x196xf32>
    %32 = vector.shape_cast %31 : vector<2x1x196xf32> to vector<2x196xf32>
    %33 = vector.shape_cast %32 : vector<2x196xf32> to vector<1x2x196xf32>
    %c0_29 = arith.constant 0 : index
    %c2 = arith.constant 2 : index
    %c0_30 = arith.constant 0 : index
    %34 = vector.load %arg6[%c0_29, %c2, %c0_30] : memref<2x8x196xf32, #tpu.memory_space<vmem>>, vector<2x1x196xf32>
    %35 = vector.shape_cast %34 : vector<2x1x196xf32> to vector<2x196xf32>
    %36 = vector.shape_cast %35 : vector<2x196xf32> to vector<1x2x196xf32>
    %c0_31 = arith.constant 0 : index
    %c3 = arith.constant 3 : index
    %c0_32 = arith.constant 0 : index
    %37 = vector.load %arg6[%c0_31, %c3, %c0_32] : memref<2x8x196xf32, #tpu.memory_space<vmem>>, vector<2x1x196xf32>
    %38 = vector.shape_cast %37 : vector<2x1x196xf32> to vector<2x196xf32>
    %39 = vector.shape_cast %38 : vector<2x196xf32> to vector<1x2x196xf32>
    %c0_33 = arith.constant 0 : index
    %c4 = arith.constant 4 : index
    %c0_34 = arith.constant 0 : index
    %40 = vector.load %arg6[%c0_33, %c4, %c0_34] : memref<2x8x196xf32, #tpu.memory_space<vmem>>, vector<2x1x196xf32>
    %41 = vector.shape_cast %40 : vector<2x1x196xf32> to vector<2x196xf32>
    %42 = vector.shape_cast %41 : vector<2x196xf32> to vector<1x2x196xf32>
    %c0_35 = arith.constant 0 : index
    %c5 = arith.constant 5 : index
    %c0_36 = arith.constant 0 : index
    %43 = vector.load %arg6[%c0_35, %c5, %c0_36] : memref<2x8x196xf32, #tpu.memory_space<vmem>>, vector<2x1x196xf32>
    %44 = vector.shape_cast %43 : vector<2x1x196xf32> to vector<2x196xf32>
    %45 = vector.shape_cast %44 : vector<2x196xf32> to vector<1x2x196xf32>
    %c0_37 = arith.constant 0 : index
    %c6 = arith.constant 6 : index
    %c0_38 = arith.constant 0 : index
    %46 = vector.load %arg6[%c0_37, %c6, %c0_38] : memref<2x8x196xf32, #tpu.memory_space<vmem>>, vector<2x1x196xf32>
    %47 = vector.shape_cast %46 : vector<2x1x196xf32> to vector<2x196xf32>
    %48 = vector.shape_cast %47 : vector<2x196xf32> to vector<1x2x196xf32>
    %c0_39 = arith.constant 0 : index
    %c7 = arith.constant 7 : index
    %c0_40 = arith.constant 0 : index
    %49 = vector.load %arg6[%c0_39, %c7, %c0_40] : memref<2x8x196xf32, #tpu.memory_space<vmem>>, vector<2x1x196xf32>
    %50 = vector.shape_cast %49 : vector<2x1x196xf32> to vector<2x196xf32>
    %51 = vector.shape_cast %50 : vector<2x196xf32> to vector<1x2x196xf32>
    %52 = tpu.concatenate %30, %33, %36, %39, %42, %45, %48, %51 in 0 : vector<1x2x196xf32>, vector<1x2x196xf32>, vector<1x2x196xf32>, vector<1x2x196xf32>, vector<1x2x196xf32>, vector<1x2x196xf32>, vector<1x2x196xf32>, vector<1x2x196xf32> -> vector<8x2x196xf32>
    %53 = arith.truncf %52 : vector<8x2x196xf32> to vector<8x2x196xbf16>
    %c0_41 = arith.constant 0 : index
    %c0_42 = arith.constant 0 : index
    %c0_43 = arith.constant 0 : index
    %54 = vector.load %arg3[%c0_41, %c0_42, %c0_43] : memref<8x32x196xbf16, #tpu.memory_space<vmem>>, vector<8x32x196xbf16>
    %cst_44 = arith.constant dense<0.000000e+00> : vector<8x2x32xf32>
    %55 = tpu.matmul %53, %54, %cst_44 {dimension_numbers = #tpu.dot_dimension_numbers<[2], [2], [1], [1], [0, 0, 0, 1, 1, 1], [0], [0]>} : vector<8x2x196xbf16>, vector<8x32x196xbf16>, vector<8x2x32xf32> -> vector<8x2x32xf32>
    %cst_45 = arith.constant dense<0.000000e+00> : vector<2x32xf32>
    %56 = vector.multi_reduction <add>, %55, %cst_45 [0] : vector<8x2x32xf32> to vector<2x32xf32>
    %c0_46 = arith.constant 0 : index
    %c0_47 = arith.constant 0 : index
    %57 = vector.load %arg4[%c0_46, %c0_47] : memref<1x32xf32, #tpu.memory_space<vmem>>, vector<1x32xf32>
    %58 = vector.broadcast %57 : vector<1x32xf32> to vector<2x32xf32>
    %59 = arith.addf %56, %58 : vector<2x32xf32>
    %c0_48 = arith.constant 0 : index
    %c0_49 = arith.constant 0 : index
    %60 = vector.load %arg7[%c0_48, %c0_49] : memref<2x32xf32, #tpu.memory_space<vmem>>, vector<2x32xf32>
    tpu.vector_store %arg7[%c0_48, %c0_49], %59 {strides = array<i32>} : memref<2x32xf32, #tpu.memory_space<vmem>>, vector<2x32xf32>,
    %cst_50 = arith.constant 0.000000e+00 : f32
    %61 = vector.broadcast %cst_50 : f32 to vector<2x32xf32>
    %62 = arith.maximumf %59, %61 : vector<2x32xf32>
    %c0_51 = arith.constant 0 : index
    %c0_52 = arith.constant 0 : index
    %63 = vector.load %arg8[%c0_51, %c0_52] : memref<2x32xf32, #tpu.memory_space<vmem>>, vector<2x32xf32>
    tpu.vector_store %arg8[%c0_51, %c0_52], %62 {strides = array<i32>} : memref<2x32xf32, #tpu.memory_space<vmem>>, vector<2x32xf32>,
    return
  }
}

</mosaic_0001>

<llo_original>
// kernel: feature_extractor_forward.1
$region0: #{feature_extractor_forward.1}
  #allocation0 [shape = 'u32[]', space=smem, size = 0x4, offset = 0x4, fixed_abs, tag = 'smem constant byte address 0x4 - core index']
  #allocation1 [shape = 'u32[144,128]{1,0:T(1,128)}', space=vmem, size = 0x12000, scoped, tag = 'internal scratch']
  %s0 = inlined_call_operand.vmem [shape: f32[2,36,196], index: 0, kind: input, shape index: {}]
  %s1 = inlined_call_operand.vmem [shape: f32[8,36], index: 1, kind: input, shape index: {}]
  %s2 = inlined_call_operand.vmem [shape: f32[8,1], index: 2, kind: input, shape index: {}]
  %s3 = inlined_call_operand.vmem [shape: bf16[8,32,196], index: 3, kind: input, shape index: {}]
  %s4 = inlined_call_operand.vmem [shape: f32[1,32], index: 4, kind: input, shape index: {}]
  %s5 = inlined_call_operand.vmem [shape: f32[2,8,196], index: 5, kind: output, shape index: {0}]
  %s6 = inlined_call_operand.vmem [shape: f32[2,8,196], index: 6, kind: output, shape index: {1}]
  %s7 = inlined_call_operand.hbm [shape: f32[2,32], index: 7, kind: output, shape index: {2}]
  %s8 = inlined_call_operand.hbm [shape: f32[2,32], index: 8, kind: output, shape index: {3}]
  %9 = xla_tuple %s5, %s6, %s7, %s8
  %s10 = sld [smem:[#allocation0]]
  $region54: #{feature_extractor_forward.1} parent=0
    _
  %s12 = ssub.s32 1, %s10
  %s13 = scalar_select 0, %s12, %s10
  $region1: #{feature_extractor_forward.1} parent=0
    #allocation2 [shape = 'u8[1024]{0}', space=vmem, size = 0x400, scoped, tag = 'output window, operand 2, single buffered']
    #allocation3 [shape = 's32[1]{0}', space=sflag, size = 0x4, scoped, tag = 'scoped memory for feature_extractor_forward.1']
    #allocation4 [shape = 'u8[1024]{0}', space=vmem, size = 0x400, scoped, tag = 'output window, operand 3, single buffered']
    #allocation5 [shape = 's32[1]{0}', space=sflag, size = 0x4, scoped, tag = 'scoped memory for feature_extractor_forward.1']
    %14 = vsyncpa [#allocation3], 0
    %15 = vsyncpa [#allocation5], 0
    // Predicated region
    $region2: #{feature_extractor_forward.1} parent=1 // pred_check
      _
    $region3: #{feature_extractor_forward.1} parent=1 // pred_check_branch
      %17 = sbr.rel (0) target = $region5
    $region4: #{feature_extractor_forward.1} parent=1 // pred_region
      _
    $region5: #{feature_extractor_forward.1} parent=1 // pred_fallthru
      _
    // Predicated region
    $region6: #{feature_extractor_forward.1} parent=1 // pred_check
      _
    $region7: #{feature_extractor_forward.1} parent=1 // pred_check_branch
      %19 = sbr.rel (0) target = $region9
    $region8: #{feature_extractor_forward.1} parent=1 // pred_region
      _
    $region9: #{feature_extractor_forward.1} parent=1 // pred_fallthru
      _
    // Predicated region
    $region10: #{feature_extractor_forward.1} parent=1 // pred_check
      _
    $region11: #{feature_extractor_forward.1} parent=1 // pred_check_branch
      %21 = sbr.rel (0) target = $region13
    $region12: #{feature_extractor_forward.1} parent=1 // pred_region
      _
    $region13: #{feature_extractor_forward.1} parent=1 // pred_fallthru
      _
    // Predicated region
    $region14: #{feature_extractor_forward.1} parent=1 // pred_check
      _
    $region15: #{feature_extractor_forward.1} parent=1 // pred_check_branch
      %23 = sbr.rel (0) target = $region17
    $region16: #{feature_extractor_forward.1} parent=1 // pred_region
      _
    $region17: #{feature_extractor_forward.1} parent=1 // pred_fallthru
      _
    // Predicated region
    $region18: #{feature_extractor_forward.1} parent=1 // pred_check
      _
    $region19: #{feature_extractor_forward.1} parent=1 // pred_check_branch
      %25 = sbr.rel (0) target = $region21
    $region20: #{feature_extractor_forward.1} parent=1 // pred_region
      _
    $region21: #{feature_extractor_forward.1} parent=1 // pred_fallthru
      _
    %v27 = vld [vmem:[%s1] sm:$0xff]
    %v28 = vld [vmem:[%s2] sm:$0xff]
    %v29 = vld [vmem:[%s0] sm:$0xff]
    %v30 = vld [vmem:[%s0 + $0x8] sm:$0xff]
    %v31 = vld [vmem:[%s0 + $0x10] sm:$0xff]
    %v32 = vld [vmem:[%s0 + $0x18] sm:$0xff]
    %v33 = vld [vmem:[%s0 + $0x20] sm:$0xff]
    %v34 = vld [vmem:[%s0 + $0x28] sm:$0xff]
    %v35 = vld [vmem:[%s0 + $0x30] sm:$0xff]
    %v36 = vld [vmem:[%s0 + $0x38] sm:$0xff]
    %v37 = vld [vmem:[%s0 + $0x40] sm:$0xf]
    %v38 = vld [vmem:[%s0 + $0x48] sm:$0xf]
    %40 = vset.pattern.permute.xlu0 0
    %41 = vperm.xlu0 %40, %v28
    %v42 = vpop.permute.xlu0 %41
    %vm44 = vcmask 293888
    %v46 = vsel %vm44, %v27, 0
    %vm48 = vcmask 1043456
    %v50 = vsel %vm48, %v37, 0
    %v53 = vsel %vm48, %v38, 0
    %55 = vmatprep.subr.mxu0 %v30
    %56 = vmatpush1.msra.mxu0 %v29
    %57 = vmatprep.subr.mxu0 %v32
    %58 = vmatpush1.msra.mxu0 %v31
    %59 = vmatprep.subr.mxu0 %v34
    %60 = vmatpush1.msra.mxu0 %v33
    %61 = vmatprep.subr.mxu0 %v36
    %62 = vmatpush1.msra.mxu0 %v35
    %63 = vmatprep.subr.mxu0 %v53
    %64 = vmatpush1.msra.mxu0 %v50
    %65 = vmatprep.subr.mxu0 0.0
    %66 = vmatpush1.msra.mxu0 0.0
    %67 = vmatprep.subr.mxu0 0.0
    %68 = vmatpush1.msra.mxu0 0.0
    %69 = vmatprep.subr.mxu0 0.0
    %70 = vmatpush1.msra.mxu0 0.0
    %71 = vmatprep.subr.mxu0 0.0
    %72 = vmatpush1.msra.mxu0 0.0
    %73 = vmatprep.subr.mxu0 0.0
    %74 = vmatpush1.msra.mxu0 0.0
    %75 = vmatprep.subr.mxu0 0.0
    %76 = vmatpush1.msra.mxu0 0.0
    %77 = vmatprep.subr.mxu0 0.0
    %78 = vmatpush1.msra.mxu0 0.0
    %79 = vmatprep.subr.mxu0 0.0
    %80 = vmatpush1.msra.mxu0 0.0
    %81 = vmatprep.subr.mxu0 0.0
    %82 = vmatpush1.msra.mxu0 0.0
    %83 = vmatprep.subr.mxu0 0.0
    %84 = vmatpush1.msra.mxu0 0.0
    %85 = vmatprep.subr.mxu0 0.0
    %86 = vmatpush1.msra.mxu0 0.0
    %87 = vmatprep.subr.mxu0 0.0
    %88 = vmatpush1.msra.mxu0 0.0
    %89 = vmatprep.subr.mxu0 0.0
    %90 = vmatpush1.msra.mxu0 0.0
    %91 = vmatprep.subr.mxu0 0.0
    %92 = vmatpush1.msra.mxu0 0.0
    %93 = vmatprep.subr.mxu0 0.0
    %94 = vmatpush1.msra.mxu0 0.0
    %95 = vmatprep.subr.mxu0 0.0
    %96 = vmatpush1.msra.mxu0 0.0
    %97 = vmatprep.subr.mxu0 0.0
    %98 = vmatpush1.msra.mxu0 0.0
    %99 = vmatprep.subr.mxu0 0.0
    %100 = vmatpush1.msra.mxu0 0.0
    %101 = vmatprep.subr.mxu0 0.0
    %102 = vmatpush1.msra.mxu0 0.0
    %103 = vmatprep.subr.mxu0 0.0
    %104 = vmatpush1.msra.mxu0 0.0
    %105 = vmatprep.subr.mxu0 0.0
    %106 = vmatpush1.msra.mxu0 0.0
    %107 = vmatprep.subr.mxu0 0.0
    %108 = vmatpush1.msra.mxu0 0.0
    %109 = vmatprep.subr.mxu0 0.0
    %110 = vmatpush1.msra.mxu0 0.0
    %111 = vmatprep.subr.mxu0 0.0
    %112 = vmatpush1.msra.mxu0 0.0
    %113 = vmatprep.subr.mxu0 0.0
    %114 = vmatpush1.msra.mxu0 0.0
    %115 = vmatprep.subr.mxu0 0.0
    %116 = vmatpush1.msra.mxu0 0.0
    %117 = vmatprep.subr.mxu0 0.0
    %118 = vmatpush1.msra.mxu0 0.0
    %119 = vmatprep.mubr.f32.mxu0 0.0
    %120 = vmatmul.mubr.f32.gmra.mrb[0].mxu0 %v46
    %v121 = vpop.f32.mrb[0].mxu0
    %v122 = vadd.f32 %v42, %v121
    %v123 = vpop.f32.mrb[0].mxu0
    %v124 = vadd.f32 %v42, %v123
    %125 = vdwg.mxu0
    %126 = vst [vmem:[%s5] sm:$0xff] %v122
    %vm127 = vcmask 556032
    %128 = vst.msk [vmem:[%s5 + $0x8] sm:$0xff] %vm127, %v124
    %v129 = vmax.f32 %v122, 0.0
    %v130 = vmax.f32 %v124, 0.0
    %131 = vst [vmem:[%s6] sm:$0xff] %v129
    %132 = vst.msk [vmem:[%s6 + $0x8] sm:$0xff] %vm127, %v130
    %s133 = scalar_lea.vmem %s0, 80
    %v134 = vld [vmem:[%s133] sm:$0xff]
    %v135 = vld [vmem:[%s133 + $0x8] sm:$0xff]
    %v136 = vld [vmem:[%s133 + $0x10] sm:$0xff]
    %v137 = vld [vmem:[%s133 + $0x18] sm:$0xff]
    %v138 = vld [vmem:[%s133 + $0x20] sm:$0xff]
    %v139 = vld [vmem:[%s133 + $0x28] sm:$0xff]
    %v140 = vld [vmem:[%s133 + $0x30] sm:$0xff]
    %v141 = vld [vmem:[%s133 + $0x38] sm:$0xff]
    %v142 = vld [vmem:[%s133 + $0x40] sm:$0xf]
    %v143 = vld [vmem:[%s133 + $0x48] sm:$0xf]
    %v145 = vsel %vm48, %v142, 0
    %v148 = vsel %vm48, %v143, 0
    %150 = vmatprep.subr.mxu0 %v135
    %151 = vmatpush1.msra.mxu0 %v134
    %152 = vmatprep.subr.mxu0 %v137
    %153 = vmatpush1.msra.mxu0 %v136
    %154 = vmatprep.subr.mxu0 %v139
    %155 = vmatpush1.msra.mxu0 %v138
    %156 = vmatprep.subr.mxu0 %v141
    %157 = vmatpush1.msra.mxu0 %v140
    %158 = vmatprep.subr.mxu0 %v148
    %159 = vmatpush1.msra.mxu0 %v145
    %160 = vmatprep.subr.mxu0 0.0
    %161 = vmatpush1.msra.mxu0 0.0
    %162 = vmatprep.subr.mxu0 0.0
    %163 = vmatpush1.msra.mxu0 0.0
    %164 = vmatprep.subr.mxu0 0.0
    %165 = vmatpush1.msra.mxu0 0.0
    %166 = vmatprep.subr.mxu0 0.0
    %167 = vmatpush1.msra.mxu0 0.0
    %168 = vmatprep.subr.mxu0 0.0
    %169 = vmatpush1.msra.mxu0 0.0
    %170 = vmatprep.subr.mxu0 0.0
    %171 = vmatpush1.msra.mxu0 0.0
    %172 = vmatprep.subr.mxu0 0.0
    %173 = vmatpush1.msra.mxu0 0.0
    %174 = vmatprep.subr.mxu0 0.0
    %175 = vmatpush1.msra.mxu0 0.0
    %176 = vmatprep.subr.mxu0 0.0
    %177 = vmatpush1.msra.mxu0 0.0
    %178 = vmatprep.subr.mxu0 0.0
    %179 = vmatpush1.msra.mxu0 0.0
    %180 = vmatprep.subr.mxu0 0.0
    %181 = vmatpush1.msra.mxu0 0.0
    %182 = vmatprep.subr.mxu0 0.0
    %183 = vmatpush1.msra.mxu0 0.0
    %184 = vmatprep.subr.mxu0 0.0
    %185 = vmatpush1.msra.mxu0 0.0
    %186 = vmatprep.subr.mxu0 0.0
    %187 = vmatpush1.msra.mxu0 0.0
    %188 = vmatprep.subr.mxu0 0.0
    %189 = vmatpush1.msra.mxu0 0.0
    %190 = vmatprep.subr.mxu0 0.0
    %191 = vmatpush1.msra.mxu0 0.0
    %192 = vmatprep.subr.mxu0 0.0
    %193 = vmatpush1.msra.mxu0 0.0
    %194 = vmatprep.subr.mxu0 0.0
    %195 = vmatpush1.msra.mxu0 0.0
    %196 = vmatprep.subr.mxu0 0.0
    %197 = vmatpush1.msra.mxu0 0.0
    %198 = vmatprep.subr.mxu0 0.0
    %199 = vmatpush1.msra.mxu0 0.0
    %200 = vmatprep.subr.mxu0 0.0
    %201 = vmatpush1.msra.mxu0 0.0
    %202 = vmatprep.subr.mxu0 0.0
    %203 = vmatpush1.msra.mxu0 0.0
    %204 = vmatprep.subr.mxu0 0.0
    %205 = vmatpush1.msra.mxu0 0.0
    %206 = vmatprep.subr.mxu0 0.0
    %207 = vmatpush1.msra.mxu0 0.0
    %208 = vmatprep.subr.mxu0 0.0
    %209 = vmatpush1.msra.mxu0 0.0
    %210 = vmatprep.subr.mxu0 0.0
    %211 = vmatpush1.msra.mxu0 0.0
    %212 = vmatprep.subr.mxu0 0.0
    %213 = vmatpush1.msra.mxu0 0.0
    %214 = vmatprep.mubr.f32.mxu0 0.0
    %215 = vmatmul.mubr.f32.gmra.mrb[0].mxu0 %v46
    %v216 = vpop.f32.mrb[0].mxu0
    %v217 = vadd.f32 %v42, %v216
    %v218 = vpop.f32.mrb[0].mxu0
    %v219 = vadd.f32 %v42, %v218
    %220 = vdwg.mxu0
    %s221 = scalar_lea.vmem %s5, 16
    %222 = vst [vmem:[%s221] sm:$0xff] %v217
    %223 = vst.msk [vmem:[%s221 + $0x8] sm:$0xff] %vm127, %v219
    %v224 = vmax.f32 %v217, 0.0
    %v225 = vmax.f32 %v219, 0.0
    %s226 = scalar_lea.vmem %s6, 16
    %227 = vst [vmem:[%s226] sm:$0xff] %v224
    %228 = vst.msk [vmem:[%s226 + $0x8] sm:$0xff] %vm127, %v225
    %v229 = vld [vmem:[%s6] ss:$8 sm:$0x3]
    %s230 = scalar_lea.vmem %s6, 16
    %v231 = vld [vmem:[%s230] ss:$8 sm:$0x3]
    %s232 = scalar_lea.vmem %s6, 1
    %v233 = vld [vmem:[%s232] ss:$8 sm:$0x3]
    %s234 = scalar_lea.vmem %s6, 17
    %v235 = vld [vmem:[%s234] ss:$8 sm:$0x3]
    %s236 = scalar_lea.vmem %s6, 2
    %v237 = vld [vmem:[%s236] ss:$8 sm:$0x3]
    %s238 = scalar_lea.vmem %s6, 18
    %v239 = vld [vmem:[%s238] ss:$8 sm:$0x3]
    %s240 = scalar_lea.vmem %s6, 3
    %v241 = vld [vmem:[%s240] ss:$8 sm:$0x3]
    %s242 = scalar_lea.vmem %s6, 19
    %v243 = vld [vmem:[%s242] ss:$8 sm:$0x3]
    %s244 = scalar_lea.vmem %s6, 4
    %v245 = vld [vmem:[%s244] ss:$8 sm:$0x3]
    %s246 = scalar_lea.vmem %s6, 20
    %v247 = vld [vmem:[%s246] ss:$8 sm:$0x3]
    %s248 = scalar_lea.vmem %s6, 5
    %v249 = vld [vmem:[%s248] ss:$8 sm:$0x3]
    %s250 = scalar_lea.vmem %s6, 21
    %v251 = vld [vmem:[%s250] ss:$8 sm:$0x3]
    %s252 = scalar_lea.vmem %s6, 6
    %v253 = vld [vmem:[%s252] ss:$8 sm:$0x3]
    %s254 = scalar_lea.vmem %s6, 22
    %v255 = vld [vmem:[%s254] ss:$8 sm:$0x3]
    %s256 = scalar_lea.vmem %s6, 7
    %v257 = vld [vmem:[%s256] ss:$8 sm:$0x3]
    %s258 = scalar_lea.vmem %s6, 23
    %v259 = vld [vmem:[%s258] ss:$8 sm:$0x3]
    %v276 = vlaneseq
    %v277 = vshrl.u32 %v276, 7
    %v278 = vsub.s32 0, %v277
    %v279 = vrot.slane %v229, %v278
    %v280 = vlaneseq
    %v281 = vshrl.u32 %v280, 7
    %v282 = vsub.s32 1, %v281
    %v283 = vrot.slane %v229, %v282
    %v284 = vlaneseq
    %v285 = vshrl.u32 %v284, 7
    %v286 = vsub.s32 0, %v285
    %v287 = vrot.slane %v231, %v286
    %v288 = vlaneseq
    %v289 = vshrl.u32 %v288, 7
    %v290 = vsub.s32 1, %v289
    %v291 = vrot.slane %v231, %v290
    %v292 = vlaneseq
    %v293 = vshrl.u32 %v292, 7
    %v294 = vsub.s32 0, %v293
    %v295 = vrot.slane %v233, %v294
    %v296 = vlaneseq
    %v297 = vshrl.u32 %v296, 7
    %v298 = vsub.s32 1, %v297
    %v299 = vrot.slane %v233, %v298
    %v300 = vlaneseq
    %v301 = vshrl.u32 %v300, 7
    %v302 = vsub.s32 0, %v301
    %v303 = vrot.slane %v235, %v302
    %v304 = vlaneseq
    %v305 = vshrl.u32 %v304, 7
    %v306 = vsub.s32 1, %v305
    %v307 = vrot.slane %v235, %v306
    %v308 = vlaneseq
    %v309 = vshrl.u32 %v308, 7
    %v310 = vsub.s32 0, %v309
    %v311 = vrot.slane %v237, %v310
    %v312 = vlaneseq
    %v313 = vshrl.u32 %v312, 7
    %v314 = vsub.s32 1, %v313
    %v315 = vrot.slane %v237, %v314
    %v316 = vlaneseq
    %v317 = vshrl.u32 %v316, 7
    %v318 = vsub.s32 0, %v317
    %v319 = vrot.slane %v239, %v318
    %v320 = vlaneseq
    %v321 = vshrl.u32 %v320, 7
    %v322 = vsub.s32 1, %v321
    %v323 = vrot.slane %v239, %v322
    %v324 = vlaneseq
    %v325 = vshrl.u32 %v324, 7
    %v326 = vsub.s32 0, %v325
    %v327 = vrot.slane %v241, %v326
    %v328 = vlaneseq
    %v329 = vshrl.u32 %v328, 7
    %v330 = vsub.s32 1, %v329
    %v331 = vrot.slane %v241, %v330
    %v332 = vlaneseq
    %v333 = vshrl.u32 %v332, 7
    %v334 = vsub.s32 0, %v333
    %v335 = vrot.slane %v243, %v334
    %v336 = vlaneseq
    %v337 = vshrl.u32 %v336, 7
    %v338 = vsub.s32 1, %v337
    %v339 = vrot.slane %v243, %v338
    %v340 = vlaneseq
    %v341 = vshrl.u32 %v340, 7
    %v342 = vsub.s32 0, %v341
    %v343 = vrot.slane %v245, %v342
    %v344 = vlaneseq
    %v345 = vshrl.u32 %v344, 7
    %v346 = vsub.s32 1, %v345
    %v347 = vrot.slane %v245, %v346
    %v348 = vlaneseq
    %v349 = vshrl.u32 %v348, 7
    %v350 = vsub.s32 0, %v349
    %v351 = vrot.slane %v247, %v350
    %v352 = vlaneseq
    %v353 = vshrl.u32 %v352, 7
    %v354 = vsub.s32 1, %v353
    %v355 = vrot.slane %v247, %v354
    %v356 = vlaneseq
    %v357 = vshrl.u32 %v356, 7
    %v358 = vsub.s32 0, %v357
    %v359 = vrot.slane %v249, %v358
    %v360 = vlaneseq
    %v361 = vshrl.u32 %v360, 7
    %v362 = vsub.s32 1, %v361
    %v363 = vrot.slane %v249, %v362
    %v364 = vlaneseq
    %v365 = vshrl.u32 %v364, 7
    %v366 = vsub.s32 0, %v365
    %v367 = vrot.slane %v251, %v366
    %v368 = vlaneseq
    %v369 = vshrl.u32 %v368, 7
    %v370 = vsub.s32 1, %v369
    %v371 = vrot.slane %v251, %v370
    %v372 = vlaneseq
    %v373 = vshrl.u32 %v372, 7
    %v374 = vsub.s32 0, %v373
    %v375 = vrot.slane %v253, %v374
    %v376 = vlaneseq
    %v377 = vshrl.u32 %v376, 7
    %v378 = vsub.s32 1, %v377
    %v379 = vrot.slane %v253, %v378
    %v380 = vlaneseq
    %v381 = vshrl.u32 %v380, 7
    %v382 = vsub.s32 0, %v381
    %v383 = vrot.slane %v255, %v382
    %v384 = vlaneseq
    %v385 = vshrl.u32 %v384, 7
    %v386 = vsub.s32 1, %v385
    %v387 = vrot.slane %v255, %v386
    %v388 = vlaneseq
    %v389 = vshrl.u32 %v388, 7
    %v390 = vsub.s32 0, %v389
    %v391 = vrot.slane %v257, %v390
    %v392 = vlaneseq
    %v393 = vshrl.u32 %v392, 7
    %v394 = vsub.s32 1, %v393
    %v395 = vrot.slane %v257, %v394
    %v396 = vlaneseq
    %v397 = vshrl.u32 %v396, 7
    %v398 = vsub.s32 0, %v397
    %v399 = vrot.slane %v259, %v398
    %v400 = vlaneseq
    %v401 = vshrl.u32 %v400, 7
    %v402 = vsub.s32 1, %v401
    %v403 = vrot.slane %v259, %v402
    %v436 = vpack.c.bf16 %v279, %v279
    %v437 = vpack.c.bf16 %v283, %v283
    %v438 = vpack.c.bf16 %v287, %v287
    %v439 = vpack.c.bf16 %v291, %v291
    %v440 = vpack.c.bf16 %v295, %v295
    %v441 = vpack.c.bf16 %v299, %v299
    %v442 = vpack.c.bf16 %v303, %v303
    %v443 = vpack.c.bf16 %v307, %v307
    %v444 = vpack.c.bf16 %v311, %v311
    %v445 = vpack.c.bf16 %v315, %v315
    %v446 = vpack.c.bf16 %v319, %v319
    %v447 = vpack.c.bf16 %v323, %v323
    %v448 = vpack.c.bf16 %v327, %v327
    %v449 = vpack.c.bf16 %v331, %v331
    %v450 = vpack.c.bf16 %v335, %v335
    %v451 = vpack.c.bf16 %v339, %v339
    %v452 = vpack.c.bf16 %v343, %v343
    %v453 = vpack.c.bf16 %v347, %v347
    %v454 = vpack.c.bf16 %v351, %v351
    %v455 = vpack.c.bf16 %v355, %v355
    %v456 = vpack.c.bf16 %v359, %v359
    %v457 = vpack.c.bf16 %v363, %v363
    %v458 = vpack.c.bf16 %v367, %v367
    %v459 = vpack.c.bf16 %v371, %v371
    %v460 = vpack.c.bf16 %v375, %v375
    %v461 = vpack.c.bf16 %v379, %v379
    %v462 = vpack.c.bf16 %v383, %v383
    %v463 = vpack.c.bf16 %v387, %v387
    %v464 = vpack.c.bf16 %v391, %v391
    %v465 = vpack.c.bf16 %v395, %v395
    %v466 = vpack.c.bf16 %v399, %v399
    %v467 = vpack.c.bf16 %v403, %v403
    %v468 = vld [vmem:[%s3] sm:$0xff]
    %v469 = vld [vmem:[%s3 + $0x8] sm:$0xff]
    %v470 = vld [vmem:[%s3 + $0x10] sm:$0xff]
    %v471 = vld [vmem:[%s3 + $0x18] sm:$0xff]
    %v472 = vld [vmem:[%s3 + $0x20] sm:$0xff]
    %v473 = vld [vmem:[%s3 + $0x28] sm:$0xff]
    %v474 = vld [vmem:[%s3 + $0x30] sm:$0xff]
    %v475 = vld [vmem:[%s3 + $0x38] sm:$0xff]
    %v476 = vld [vmem:[%s3 + $0x40] sm:$0xff]
    %v477 = vld [vmem:[%s3 + $0x48] sm:$0xff]
    %v478 = vld [vmem:[%s3 + $0x50] sm:$0xff]
    %v479 = vld [vmem:[%s3 + $0x58] sm:$0xff]
    %v480 = vld [vmem:[%s3 + $0x60] sm:$0xff]
    %v481 = vld [vmem:[%s3 + $0x68] sm:$0xff]
    %v482 = vld [vmem:[%s3 + $0x70] sm:$0xff]
    %v483 = vld [vmem:[%s3 + $0x78] sm:$0xff]
    %v484 = vld [vmem:[%s3 + $0x80] sm:$0xff]
    %v485 = vld [vmem:[%s3 + $0x88] sm:$0xff]
    %v486 = vld [vmem:[%s3 + $0x90] sm:$0xff]
    %v487 = vld [vmem:[%s3 + $0x98] sm:$0xff]
    %v488 = vld [vmem:[%s3 + $0xa0] sm:$0xff]
    %v489 = vld [vmem:[%s3 + $0xa8] sm:$0xff]
    %v490 = vld [vmem:[%s3 + $0xb0] sm:$0xff]
    %v491 = vld [vmem:[%s3 + $0xb8] sm:$0xff]
    %v492 = vld [vmem:[%s3 + $0xc0] sm:$0xff]
    %v493 = vld [vmem:[%s3 + $0xc8] sm:$0xff]
    %v494 = vld [vmem:[%s3 + $0xd0] sm:$0xff]
    %v495 = vld [vmem:[%s3 + $0xd8] sm:$0xff]
    %v496 = vld [vmem:[%s3 + $0xe0] sm:$0xff]
    %v497 = vld [vmem:[%s3 + $0xe8] sm:$0xff]
    %v498 = vld [vmem:[%s3 + $0xf0] sm:$0xff]
    %v499 = vld [vmem:[%s3 + $0xf8] sm:$0xff]
    %v504 = vunpack.c.l.b16 %v436
    %v505 = vunpack.c.l.b16 %v437
    %v506 = vunpack.c.l.b16 %v438
    %v507 = vunpack.c.l.b16 %v439
    %v508 = vrot.slane %v506, 7
    %vm509 = vcmask 1041409
    %v510 = vsel %vm509, %v508, %v504
    %v511 = vrot.slane %v507, 7
    %v512 = vsel %vm509, %v511, %v505
    %v513 = vpack.c.b16 %v510, %v510
    %v514 = vpack.c.b16 %v512, %v512
    %v520 = vunpack.c.l.b16 %v468
    %v521 = vunpack.c.h.b16 %v468
    %v522 = vunpack.c.l.b16 %v469
    %v523 = vunpack.c.h.b16 %v469
    %v524 = vunpack.c.l.b16 %v470
    %v525 = vunpack.c.h.b16 %v470
    %v526 = vunpack.c.l.b16 %v471
    %v527 = vunpack.c.h.b16 %v471
    %v528 = vpack.c.b16 %v522, %v520
    %v529 = vpack.c.b16 %v523, %v521
    %v530 = vpack.c.b16 %v526, %v524
    %v531 = vpack.c.b16 %v527, %v525
    %v535 = vsel %vm127, %v514, 0
    %v538 = vsel %vm127, %v529, 0
    %v541 = vsel %vm127, %v531, 0
    %543 = vmatprep.subr.bf16.mxu0 %v538
    %544 = vmatpush1.bf16.xpose.msra.mxu0 %v528
    %545 = vmatprep.subr.bf16.mxu0 %v541
    %546 = vmatpush1.bf16.xpose.msra.mxu0 %v530
    %547 = vmatprep.subr.bf16.mxu0 0
    %548 = vmatpush1.bf16.xpose.msra.mxu0 0
    %549 = vmatprep.subr.bf16.mxu0 0
    %550 = vmatpush1.bf16.xpose.msra.mxu0 0
    %551 = vmatprep.subr.bf16.mxu0 0
    %552 = vmatpush1.bf16.xpose.msra.mxu0 0
    %553 = vmatprep.subr.bf16.mxu0 0
    %554 = vmatpush1.bf16.xpose.msra.mxu0 0
    %555 = vmatprep.subr.bf16.mxu0 0
    %556 = vmatpush1.bf16.xpose.msra.mxu0 0
    %557 = vmatprep.subr.bf16.mxu0 0
    %558 = vmatpush1.bf16.xpose.msra.mxu0 0
    %559 = vmatprep.subr.bf16.mxu0 0
    %560 = vmatpush1.bf16.xpose.msra.mxu0 0
    %561 = vmatprep.subr.bf16.mxu0 0
    %562 = vmatpush1.bf16.xpose.msra.mxu0 0
    %563 = vmatprep.subr.bf16.mxu0 0
    %564 = vmatpush1.bf16.xpose.msra.mxu0 0
    %565 = vmatprep.subr.bf16.mxu0 0
    %566 = vmatpush1.bf16.xpose.msra.mxu0 0
    %567 = vmatprep.subr.bf16.mxu0 0
    %568 = vmatpush1.bf16.xpose.msra.mxu0 0
    %569 = vmatprep.subr.bf16.mxu0 0
    %570 = vmatpush1.bf16.xpose.msra.mxu0 0
    %571 = vmatprep.subr.bf16.mxu0 0
    %572 = vmatpush1.bf16.xpose.msra.mxu0 0
    %573 = vmatprep.subr.bf16.mxu0 0
    %574 = vmatpush1.bf16.xpose.msra.mxu0 0
    %575 = vmatprep.mubr.bf16.mxu0 %v535
    %576 = vmatmul.mubr.bf16.gmra.mrb[0].mxu0 %v513
    %v577 = vpop.f32.mrb[0].mxu0
    %v578 = vadd.f32 0.0, %v577
    %v579 = vpop.f32.mrb[0].mxu0
    %v580 = vpop.f32.mrb[0].mxu0
    %v581 = vpop.f32.mrb[0].mxu0
    %582 = vdwg.mxu0
    %v587 = vunpack.c.l.b16 %v440
    %v588 = vunpack.c.l.b16 %v441
    %v589 = vunpack.c.l.b16 %v442
    %v590 = vunpack.c.l.b16 %v443
    %v591 = vrot.slane %v589, 7
    %v592 = vsel %vm509, %v591, %v587
    %v593 = vrot.slane %v590, 7
    %v594 = vsel %vm509, %v593, %v588
    %v595 = vpack.c.b16 %v592, %v592
    %v596 = vpack.c.b16 %v594, %v594
    %v602 = vunpack.c.l.b16 %v472
    %v603 = vunpack.c.h.b16 %v472
    %v604 = vunpack.c.l.b16 %v473
    %v605 = vunpack.c.h.b16 %v473
    %v606 = vunpack.c.l.b16 %v474
    %v607 = vunpack.c.h.b16 %v474
    %v608 = vunpack.c.l.b16 %v475
    %v609 = vunpack.c.h.b16 %v475
    %v610 = vpack.c.b16 %v604, %v602
    %v611 = vpack.c.b16 %v605, %v603
    %v612 = vpack.c.b16 %v608, %v606
    %v613 = vpack.c.b16 %v609, %v607
    %v617 = vsel %vm127, %v596, 0
    %v620 = vsel %vm127, %v611, 0
    %v623 = vsel %vm127, %v613, 0
    %625 = vmatprep.subr.bf16.mxu0 %v620
    %626 = vmatpush1.bf16.xpose.msra.mxu0 %v610
    %627 = vmatprep.subr.bf16.mxu0 %v623
    %628 = vmatpush1.bf16.xpose.msra.mxu0 %v612
    %629 = vmatprep.subr.bf16.mxu0 0
    %630 = vmatpush1.bf16.xpose.msra.mxu0 0
    %631 = vmatprep.subr.bf16.mxu0 0
    %632 = vmatpush1.bf16.xpose.msra.mxu0 0
    %633 = vmatprep.subr.bf16.mxu0 0
    %634 = vmatpush1.bf16.xpose.msra.mxu0 0
    %635 = vmatprep.subr.bf16.mxu0 0
    %636 = vmatpush1.bf16.xpose.msra.mxu0 0
    %637 = vmatprep.subr.bf16.mxu0 0
    %638 = vmatpush1.bf16.xpose.msra.mxu0 0
    %639 = vmatprep.subr.bf16.mxu0 0
    %640 = vmatpush1.bf16.xpose.msra.mxu0 0
    %641 = vmatprep.subr.bf16.mxu0 0
    %642 = vmatpush1.bf16.xpose.msra.mxu0 0
    %643 = vmatprep.subr.bf16.mxu0 0
    %644 = vmatpush1.bf16.xpose.msra.mxu0 0
    %645 = vmatprep.subr.bf16.mxu0 0
    %646 = vmatpush1.bf16.xpose.msra.mxu0 0
    %647 = vmatprep.subr.bf16.mxu0 0
    %648 = vmatpush1.bf16.xpose.msra.mxu0 0
    %649 = vmatprep.subr.bf16.mxu0 0
    %650 = vmatpush1.bf16.xpose.msra.mxu0 0
    %651 = vmatprep.subr.bf16.mxu0 0
    %652 = vmatpush1.bf16.xpose.msra.mxu0 0
    %653 = vmatprep.subr.bf16.mxu0 0
    %654 = vmatpush1.bf16.xpose.msra.mxu0 0
    %655 = vmatprep.subr.bf16.mxu0 0
    %656 = vmatpush1.bf16.xpose.msra.mxu0 0
    %657 = vmatprep.mubr.bf16.mxu0 %v617
    %658 = vmatmul.mubr.bf16.gmra.mrb[0].mxu0 %v595
    %v659 = vpop.f32.mrb[0].mxu0
    %v660 = vadd.f32 0.0, %v659
    %v661 = vpop.f32.mrb[0].mxu0
    %v662 = vpop.f32.mrb[0].mxu0
    %v663 = vpop.f32.mrb[0].mxu0
    %664 = vdwg.mxu0
    %v669 = vunpack.c.l.b16 %v444
    %v670 = vunpack.c.l.b16 %v445
    %v671 = vunpack.c.l.b16 %v446
    %v672 = vunpack.c.l.b16 %v447
    %v673 = vrot.slane %v671, 7
    %v674 = vsel %vm509, %v673, %v669
    %v675 = vrot.slane %v672, 7
    %v676 = vsel %vm509, %v675, %v670
    %v677 = vpack.c.b16 %v674, %v674
    %v678 = vpack.c.b16 %v676, %v676
    %v684 = vunpack.c.l.b16 %v476
    %v685 = vunpack.c.h.b16 %v476
    %v686 = vunpack.c.l.b16 %v477
    %v687 = vunpack.c.h.b16 %v477
    %v688 = vunpack.c.l.b16 %v478
    %v689 = vunpack.c.h.b16 %v478
    %v690 = vunpack.c.l.b16 %v479
    %v691 = vunpack.c.h.b16 %v479
    %v692 = vpack.c.b16 %v686, %v684
    %v693 = vpack.c.b16 %v687, %v685
    %v694 = vpack.c.b16 %v690, %v688
    %v695 = vpack.c.b16 %v691, %v689
    %v699 = vsel %vm127, %v678, 0
    %v702 = vsel %vm127, %v693, 0
    %v705 = vsel %vm127, %v695, 0
    %707 = vmatprep.subr.bf16.mxu0 %v702
    %708 = vmatpush1.bf16.xpose.msra.mxu0 %v692
    %709 = vmatprep.subr.bf16.mxu0 %v705
    %710 = vmatpush1.bf16.xpose.msra.mxu0 %v694
    %711 = vmatprep.subr.bf16.mxu0 0
    %712 = vmatpush1.bf16.xpose.msra.mxu0 0
    %713 = vmatprep.subr.bf16.mxu0 0
    %714 = vmatpush1.bf16.xpose.msra.mxu0 0
    %715 = vmatprep.subr.bf16.mxu0 0
    %716 = vmatpush1.bf16.xpose.msra.mxu0 0
    %717 = vmatprep.subr.bf16.mxu0 0
    %718 = vmatpush1.bf16.xpose.msra.mxu0 0
    %719 = vmatprep.subr.bf16.mxu0 0
    %720 = vmatpush1.bf16.xpose.msra.mxu0 0
    %721 = vmatprep.subr.bf16.mxu0 0
    %722 = vmatpush1.bf16.xpose.msra.mxu0 0
    %723 = vmatprep.subr.bf16.mxu0 0
    %724 = vmatpush1.bf16.xpose.msra.mxu0 0
    %725 = vmatprep.subr.bf16.mxu0 0
    %726 = vmatpush1.bf16.xpose.msra.mxu0 0
    %727 = vmatprep.subr.bf16.mxu0 0
    %728 = vmatpush1.bf16.xpose.msra.mxu0 0
    %729 = vmatprep.subr.bf16.mxu0 0
    %730 = vmatpush1.bf16.xpose.msra.mxu0 0
    %731 = vmatprep.subr.bf16.mxu0 0
    %732 = vmatpush1.bf16.xpose.msra.mxu0 0
    %733 = vmatprep.subr.bf16.mxu0 0
    %734 = vmatpush1.bf16.xpose.msra.mxu0 0
    %735 = vmatprep.subr.bf16.mxu0 0
    %736 = vmatpush1.bf16.xpose.msra.mxu0 0
    %737 = vmatprep.subr.bf16.mxu0 0
    %738 = vmatpush1.bf16.xpose.msra.mxu0 0
    %739 = vmatprep.mubr.bf16.mxu0 %v699
    %740 = vmatmul.mubr.bf16.gmra.mrb[0].mxu0 %v677
    %v741 = vpop.f32.mrb[0].mxu0
    %v742 = vadd.f32 0.0, %v741
    %v743 = vpop.f32.mrb[0].mxu0
    %v744 = vpop.f32.mrb[0].mxu0
    %v745 = vpop.f32.mrb[0].mxu0
    %746 = vdwg.mxu0
    %v751 = vunpack.c.l.b16 %v448
    %v752 = vunpack.c.l.b16 %v449
    %v753 = vunpack.c.l.b16 %v450
    %v754 = vunpack.c.l.b16 %v451
    %v755 = vrot.slane %v753, 7
    %v756 = vsel %vm509, %v755, %v751
    %v757 = vrot.slane %v754, 7
    %v758 = vsel %vm509, %v757, %v752
    %v759 = vpack.c.b16 %v756, %v756
    %v760 = vpack.c.b16 %v758, %v758
    %v766 = vunpack.c.l.b16 %v480
    %v767 = vunpack.c.h.b16 %v480
    %v768 = vunpack.c.l.b16 %v481
    %v769 = vunpack.c.h.b16 %v481
    %v770 = vunpack.c.l.b16 %v482
    %v771 = vunpack.c.h.b16 %v482
    %v772 = vunpack.c.l.b16 %v483
    %v773 = vunpack.c.h.b16 %v483
    %v774 = vpack.c.b16 %v768, %v766
    %v775 = vpack.c.b16 %v769, %v767
    %v776 = vpack.c.b16 %v772, %v770
    %v777 = vpack.c.b16 %v773, %v771
    %v781 = vsel %vm127, %v760, 0
    %v784 = vsel %vm127, %v775, 0
    %v787 = vsel %vm127, %v777, 0
    %789 = vmatprep.subr.bf16.mxu0 %v784
    %790 = vmatpush1.bf16.xpose.msra.mxu0 %v774
    %791 = vmatprep.subr.bf16.mxu0 %v787
    %792 = vmatpush1.bf16.xpose.msra.mxu0 %v776
    %793 = vmatprep.subr.bf16.mxu0 0
    %794 = vmatpush1.bf16.xpose.msra.mxu0 0
    %795 = vmatprep.subr.bf16.mxu0 0
    %796 = vmatpush1.bf16.xpose.msra.mxu0 0
    %797 = vmatprep.subr.bf16.mxu0 0
    %798 = vmatpush1.bf16.xpose.msra.mxu0 0
    %799 = vmatprep.subr.bf16.mxu0 0
    %800 = vmatpush1.bf16.xpose.msra.mxu0 0
    %801 = vmatprep.subr.bf16.mxu0 0
    %802 = vmatpush1.bf16.xpose.msra.mxu0 0
    %803 = vmatprep.subr.bf16.mxu0 0
    %804 = vmatpush1.bf16.xpose.msra.mxu0 0
    %805 = vmatprep.subr.bf16.mxu0 0
    %806 = vmatpush1.bf16.xpose.msra.mxu0 0
    %807 = vmatprep.subr.bf16.mxu0 0
    %808 = vmatpush1.bf16.xpose.msra.mxu0 0
    %809 = vmatprep.subr.bf16.mxu0 0
    %810 = vmatpush1.bf16.xpose.msra.mxu0 0
    %811 = vmatprep.subr.bf16.mxu0 0
    %812 = vmatpush1.bf16.xpose.msra.mxu0 0
    %813 = vmatprep.subr.bf16.mxu0 0
    %814 = vmatpush1.bf16.xpose.msra.mxu0 0
    %815 = vmatprep.subr.bf16.mxu0 0
    %816 = vmatpush1.bf16.xpose.msra.mxu0 0
    %817 = vmatprep.subr.bf16.mxu0 0
    %818 = vmatpush1.bf16.xpose.msra.mxu0 0
    %819 = vmatprep.subr.bf16.mxu0 0
    %820 = vmatpush1.bf16.xpose.msra.mxu0 0
    %821 = vmatprep.mubr.bf16.mxu0 %v781
    %822 = vmatmul.mubr.bf16.gmra.mrb[0].mxu0 %v759
    %v823 = vpop.f32.mrb[0].mxu0
    %v824 = vadd.f32 0.0, %v823
    %v825 = vpop.f32.mrb[0].mxu0
    %v826 = vpop.f32.mrb[0].mxu0
    %v827 = vpop.f32.mrb[0].mxu0
    %828 = vdwg.mxu0
    %v833 = vunpack.c.l.b16 %v452
    %v834 = vunpack.c.l.b16 %v453
    %v835 = vunpack.c.l.b16 %v454
    %v836 = vunpack.c.l.b16 %v455
    %v837 = vrot.slane %v835, 7
    %v838 = vsel %vm509, %v837, %v833
    %v839 = vrot.slane %v836, 7
    %v840 = vsel %vm509, %v839, %v834
    %v841 = vpack.c.b16 %v838, %v838
    %v842 = vpack.c.b16 %v840, %v840
    %v848 = vunpack.c.l.b16 %v484
    %v849 = vunpack.c.h.b16 %v484
    %v850 = vunpack.c.l.b16 %v485
    %v851 = vunpack.c.h.b16 %v485
    %v852 = vunpack.c.l.b16 %v486
    %v853 = vunpack.c.h.b16 %v486
    %v854 = vunpack.c.l.b16 %v487
    %v855 = vunpack.c.h.b16 %v487
    %v856 = vpack.c.b16 %v850, %v848
    %v857 = vpack.c.b16 %v851, %v849
    %v858 = vpack.c.b16 %v854, %v852
    %v859 = vpack.c.b16 %v855, %v853
    %v863 = vsel %vm127, %v842, 0
    %v866 = vsel %vm127, %v857, 0
    %v869 = vsel %vm127, %v859, 0
    %871 = vmatprep.subr.bf16.mxu0 %v866
    %872 = vmatpush1.bf16.xpose.msra.mxu0 %v856
    %873 = vmatprep.subr.bf16.mxu0 %v869
    %874 = vmatpush1.bf16.xpose.msra.mxu0 %v858
    %875 = vmatprep.subr.bf16.mxu0 0
    %876 = vmatpush1.bf16.xpose.msra.mxu0 0
    %877 = vmatprep.subr.bf16.mxu0 0
    %878 = vmatpush1.bf16.xpose.msra.mxu0 0
    %879 = vmatprep.subr.bf16.mxu0 0
    %880 = vmatpush1.bf16.xpose.msra.mxu0 0
    %881 = vmatprep.subr.bf16.mxu0 0
    %882 = vmatpush1.bf16.xpose.msra.mxu0 0
    %883 = vmatprep.subr.bf16.mxu0 0
    %884 = vmatpush1.bf16.xpose.msra.mxu0 0
    %885 = vmatprep.subr.bf16.mxu0 0
    %886 = vmatpush1.bf16.xpose.msra.mxu0 0
    %887 = vmatprep.subr.bf16.mxu0 0
    %888 = vmatpush1.bf16.xpose.msra.mxu0 0
    %889 = vmatprep.subr.bf16.mxu0 0
    %890 = vmatpush1.bf16.xpose.msra.mxu0 0
    %891 = vmatprep.subr.bf16.mxu0 0
    %892 = vmatpush1.bf16.xpose.msra.mxu0 0
    %893 = vmatprep.subr.bf16.mxu0 0
    %894 = vmatpush1.bf16.xpose.msra.mxu0 0
    %895 = vmatprep.subr.bf16.mxu0 0
    %896 = vmatpush1.bf16.xpose.msra.mxu0 0
    %897 = vmatprep.subr.bf16.mxu0 0
    %898 = vmatpush1.bf16.xpose.msra.mxu0 0
    %899 = vmatprep.subr.bf16.mxu0 0
    %900 = vmatpush1.bf16.xpose.msra.mxu0 0
    %901 = vmatprep.subr.bf16.mxu0 0
    %902 = vmatpush1.bf16.xpose.msra.mxu0 0
    %903 = vmatprep.mubr.bf16.mxu0 %v863
    %904 = vmatmul.mubr.bf16.gmra.mrb[0].mxu0 %v841
    %v905 = vpop.f32.mrb[0].mxu0
    %v906 = vadd.f32 0.0, %v905
    %v907 = vpop.f32.mrb[0].mxu0
    %v908 = vpop.f32.mrb[0].mxu0
    %v909 = vpop.f32.mrb[0].mxu0
    %910 = vdwg.mxu0
    %v915 = vunpack.c.l.b16 %v456
    %v916 = vunpack.c.l.b16 %v457
    %v917 = vunpack.c.l.b16 %v458
    %v918 = vunpack.c.l.b16 %v459
    %v919 = vrot.slane %v917, 7
    %v920 = vsel %vm509, %v919, %v915
    %v921 = vrot.slane %v918, 7
    %v922 = vsel %vm509, %v921, %v916
    %v923 = vpack.c.b16 %v920, %v920
    %v924 = vpack.c.b16 %v922, %v922
    %v930 = vunpack.c.l.b16 %v488
    %v931 = vunpack.c.h.b16 %v488
    %v932 = vunpack.c.l.b16 %v489
    %v933 = vunpack.c.h.b16 %v489
    %v934 = vunpack.c.l.b16 %v490
    %v935 = vunpack.c.h.b16 %v490
    %v936 = vunpack.c.l.b16 %v491
    %v937 = vunpack.c.h.b16 %v491
    %v938 = vpack.c.b16 %v932, %v930
    %v939 = vpack.c.b16 %v933, %v931
    %v940 = vpack.c.b16 %v936, %v934
    %v941 = vpack.c.b16 %v937, %v935
    %v945 = vsel %vm127, %v924, 0
    %v948 = vsel %vm127, %v939, 0
    %v951 = vsel %vm127, %v941, 0
    %953 = vmatprep.subr.bf16.mxu0 %v948
    %954 = vmatpush1.bf16.xpose.msra.mxu0 %v938
    %955 = vmatprep.subr.bf16.mxu0 %v951
    %956 = vmatpush1.bf16.xpose.msra.mxu0 %v940
    %957 = vmatprep.subr.bf16.mxu0 0
    %958 = vmatpush1.bf16.xpose.msra.mxu0 0
    %959 = vmatprep.subr.bf16.mxu0 0
    %960 = vmatpush1.bf16.xpose.msra.mxu0 0
    %961 = vmatprep.subr.bf16.mxu0 0
    %962 = vmatpush1.bf16.xpose.msra.mxu0 0
    %963 = vmatprep.subr.bf16.mxu0 0
    %964 = vmatpush1.bf16.xpose.msra.mxu0 0
    %965 = vmatprep.subr.bf16.mxu0 0
    %966 = vmatpush1.bf16.xpose.msra.mxu0 0
    %967 = vmatprep.subr.bf16.mxu0 0
    %968 = vmatpush1.bf16.xpose.msra.mxu0 0
    %969 = vmatprep.subr.bf16.mxu0 0
    %970 = vmatpush1.bf16.xpose.msra.mxu0 0
    %971 = vmatprep.subr.bf16.mxu0 0
    %972 = vmatpush1.bf16.xpose.msra.mxu0 0
    %973 = vmatprep.subr.bf16.mxu0 0
    %974 = vmatpush1.bf16.xpose.msra.mxu0 0
    %975 = vmatprep.subr.bf16.mxu0 0
    %976 = vmatpush1.bf16.xpose.msra.mxu0 0
    %977 = vmatprep.subr.bf16.mxu0 0
    %978 = vmatpush1.bf16.xpose.msra.mxu0 0
    %979 = vmatprep.subr.bf16.mxu0 0
    %980 = vmatpush1.bf16.xpose.msra.mxu0 0
    %981 = vmatprep.subr.bf16.mxu0 0
    %982 = vmatpush1.bf16.xpose.msra.mxu0 0
    %983 = vmatprep.subr.bf16.mxu0 0
    %984 = vmatpush1.bf16.xpose.msra.mxu0 0
    %985 = vmatprep.mubr.bf16.mxu0 %v945
    %986 = vmatmul.mubr.bf16.gmra.mrb[0].mxu0 %v923
    %v987 = vpop.f32.mrb[0].mxu0
    %v988 = vadd.f32 0.0, %v987
    %v989 = vpop.f32.mrb[0].mxu0
    %v990 = vpop.f32.mrb[0].mxu0
    %v991 = vpop.f32.mrb[0].mxu0
    %992 = vdwg.mxu0
    %v997 = vunpack.c.l.b16 %v460
    %v998 = vunpack.c.l.b16 %v461
    %v999 = vunpack.c.l.b16 %v462
    %v1000 = vunpack.c.l.b16 %v463
    %v1001 = vrot.slane %v999, 7
    %v1002 = vsel %vm509, %v1001, %v997
    %v1003 = vrot.slane %v1000, 7
    %v1004 = vsel %vm509, %v1003, %v998
    %v1005 = vpack.c.b16 %v1002, %v1002
    %v1006 = vpack.c.b16 %v1004, %v1004
    %v1012 = vunpack.c.l.b16 %v492
    %v1013 = vunpack.c.h.b16 %v492
    %v1014 = vunpack.c.l.b16 %v493
    %v1015 = vunpack.c.h.b16 %v493
    %v1016 = vunpack.c.l.b16 %v494
    %v1017 = vunpack.c.h.b16 %v494
    %v1018 = vunpack.c.l.b16 %v495
    %v1019 = vunpack.c.h.b16 %v495
    %v1020 = vpack.c.b16 %v1014, %v1012
    %v1021 = vpack.c.b16 %v1015, %v1013
    %v1022 = vpack.c.b16 %v1018, %v1016
    %v1023 = vpack.c.b16 %v1019, %v1017
    %v1027 = vsel %vm127, %v1006, 0
    %v1030 = vsel %vm127, %v1021, 0
    %v1033 = vsel %vm127, %v1023, 0
    %1035 = vmatprep.subr.bf16.mxu0 %v1030
    %1036 = vmatpush1.bf16.xpose.msra.mxu0 %v1020
    %1037 = vmatprep.subr.bf16.mxu0 %v1033
    %1038 = vmatpush1.bf16.xpose.msra.mxu0 %v1022
    %1039 = vmatprep.subr.bf16.mxu0 0
    %1040 = vmatpush1.bf16.xpose.msra.mxu0 0
    %1041 = vmatprep.subr.bf16.mxu0 0
    %1042 = vmatpush1.bf16.xpose.msra.mxu0 0
    %1043 = vmatprep.subr.bf16.mxu0 0
    %1044 = vmatpush1.bf16.xpose.msra.mxu0 0
    %1045 = vmatprep.subr.bf16.mxu0 0
    %1046 = vmatpush1.bf16.xpose.msra.mxu0 0
    %1047 = vmatprep.subr.bf16.mxu0 0
    %1048 = vmatpush1.bf16.xpose.msra.mxu0 0
    %1049 = vmatprep.subr.bf16.mxu0 0
    %1050 = vmatpush1.bf16.xpose.msra.mxu0 0
    %1051 = vmatprep.subr.bf16.mxu0 0
    %1052 = vmatpush1.bf16.xpose.msra.mxu0 0
    %1053 = vmatprep.subr.bf16.mxu0 0
    %1054 = vmatpush1.bf16.xpose.msra.mxu0 0
    %1055 = vmatprep.subr.bf16.mxu0 0
    %1056 = vmatpush1.bf16.xpose.msra.mxu0 0
    %1057 = vmatprep.subr.bf16.mxu0 0
    %1058 = vmatpush1.bf16.xpose.msra.mxu0 0
    %1059 = vmatprep.subr.bf16.mxu0 0
    %1060 = vmatpush1.bf16.xpose.msra.mxu0 0
    %1061 = vmatprep.subr.bf16.mxu0 0
    %1062 = vmatpush1.bf16.xpose.msra.mxu0 0
    %1063 = vmatprep.subr.bf16.mxu0 0
    %1064 = vmatpush1.bf16.xpose.msra.mxu0 0
    %1065 = vmatprep.subr.bf16.mxu0 0
    %1066 = vmatpush1.bf16.xpose.msra.mxu0 0
    %1067 = vmatprep.mubr.bf16.mxu0 %v1027
    %1068 = vmatmul.mubr.bf16.gmra.mrb[0].mxu0 %v1005
    %v1069 = vpop.f32.mrb[0].mxu0
    %v1070 = vadd.f32 0.0, %v1069
    %v1071 = vpop.f32.mrb[0].mxu0
    %v1072 = vpop.f32.mrb[0].mxu0
    %v1073 = vpop.f32.mrb[0].mxu0
    %1074 = vdwg.mxu0
    %v1079 = vunpack.c.l.b16 %v464
    %v1080 = vunpack.c.l.b16 %v465
    %v1081 = vunpack.c.l.b16 %v466
    %v1082 = vunpack.c.l.b16 %v467
    %v1083 = vrot.slane %v1081, 7
    %v1084 = vsel %vm509, %v1083, %v1079
    %v1085 = vrot.slane %v1082, 7
    %v1086 = vsel %vm509, %v1085, %v1080
    %v1087 = vpack.c.b16 %v1084, %v1084
    %v1088 = vpack.c.b16 %v1086, %v1086
    %v1094 = vunpack.c.l.b16 %v496
    %v1095 = vunpack.c.h.b16 %v496
    %v1096 = vunpack.c.l.b16 %v497
    %v1097 = vunpack.c.h.b16 %v497
    %v1098 = vunpack.c.l.b16 %v498
    %v1099 = vunpack.c.h.b16 %v498
    %v1100 = vunpack.c.l.b16 %v499
    %v1101 = vunpack.c.h.b16 %v499
    %v1102 = vpack.c.b16 %v1096, %v1094
    %v1103 = vpack.c.b16 %v1097, %v1095
    %v1104 = vpack.c.b16 %v1100, %v1098
    %v1105 = vpack.c.b16 %v1101, %v1099
    %v1109 = vsel %vm127, %v1088, 0
    %v1112 = vsel %vm127, %v1103, 0
    %v1115 = vsel %vm127, %v1105, 0
    %1117 = vmatprep.subr.bf16.mxu0 %v1112
    %1118 = vmatpush1.bf16.xpose.msra.mxu0 %v1102
    %1119 = vmatprep.subr.bf16.mxu0 %v1115
    %1120 = vmatpush1.bf16.xpose.msra.mxu0 %v1104
    %1121 = vmatprep.subr.bf16.mxu0 0
    %1122 = vmatpush1.bf16.xpose.msra.mxu0 0
    %1123 = vmatprep.subr.bf16.mxu0 0
    %1124 = vmatpush1.bf16.xpose.msra.mxu0 0
    %1125 = vmatprep.subr.bf16.mxu0 0
    %1126 = vmatpush1.bf16.xpose.msra.mxu0 0
    %1127 = vmatprep.subr.bf16.mxu0 0
    %1128 = vmatpush1.bf16.xpose.msra.mxu0 0
    %1129 = vmatprep.subr.bf16.mxu0 0
    %1130 = vmatpush1.bf16.xpose.msra.mxu0 0
    %1131 = vmatprep.subr.bf16.mxu0 0
    %1132 = vmatpush1.bf16.xpose.msra.mxu0 0
    %1133 = vmatprep.subr.bf16.mxu0 0
    %1134 = vmatpush1.bf16.xpose.msra.mxu0 0
    %1135 = vmatprep.subr.bf16.mxu0 0
    %1136 = vmatpush1.bf16.xpose.msra.mxu0 0
    %1137 = vmatprep.subr.bf16.mxu0 0
    %1138 = vmatpush1.bf16.xpose.msra.mxu0 0
    %1139 = vmatprep.subr.bf16.mxu0 0
    %1140 = vmatpush1.bf16.xpose.msra.mxu0 0
    %1141 = vmatprep.subr.bf16.mxu0 0
    %1142 = vmatpush1.bf16.xpose.msra.mxu0 0
    %1143 = vmatprep.subr.bf16.mxu0 0
    %1144 = vmatpush1.bf16.xpose.msra.mxu0 0
    %1145 = vmatprep.subr.bf16.mxu0 0
    %1146 = vmatpush1.bf16.xpose.msra.mxu0 0
    %1147 = vmatprep.subr.bf16.mxu0 0
    %1148 = vmatpush1.bf16.xpose.msra.mxu0 0
    %1149 = vmatprep.mubr.bf16.mxu0 %v1109
    %1150 = vmatmul.mubr.bf16.gmra.mrb[0].mxu0 %v1087
    %v1151 = vpop.f32.mrb[0].mxu0
    %v1152 = vadd.f32 0.0, %v1151
    %v1153 = vpop.f32.mrb[0].mxu0
    %v1154 = vpop.f32.mrb[0].mxu0
    %v1155 = vpop.f32.mrb[0].mxu0
    %1156 = vdwg.mxu0
    %vm1157 = vcmask 254976
    %v1158 = vsel %vm1157, %v578, 0.0
    %v1159 = vsel %vm1157, %v660, 0.0
    %v1160 = vadd.f32 %v1158, %v1159
    %v1161 = vsel %vm1157, %v742, 0.0
    %v1162 = vadd.f32 %v1160, %v1161
    %v1163 = vsel %vm1157, %v824, 0.0
    %v1164 = vadd.f32 %v1162, %v1163
    %v1165 = vsel %vm1157, %v906, 0.0
    %v1166 = vadd.f32 %v1164, %v1165
    %v1167 = vsel %vm1157, %v988, 0.0
    %v1168 = vadd.f32 %v1166, %v1167
    %v1169 = vsel %vm1157, %v1070, 0.0
    %v1170 = vadd.f32 %v1168, %v1169
    %v1171 = vsel %vm1157, %v1152, 0.0
    %v1172 = vadd.f32 %v1170, %v1171
    %v1173 = vld [vmem:[%s4] sm:$0x1]
    %v1175 = vlaneseq
    %v1176 = vshrl.u32 %v1175, 7
    %v1177 = vsub.s32 0, %v1176
    %v1178 = vrot.slane %v1173, %v1177
    %v1180 = vadd.f32 %v1172, %v1178
    %1181 = vst.msk [vmem:[#allocation2] sm:$0x3] %vm1157, %v1180
    %v1182 = vmax.f32 %v1180, 0.0
    %1183 = vst.msk [vmem:[#allocation4] sm:$0x3] %vm1157, %v1182
    // Predicated region
    $region22: #{feature_extractor_forward.1} parent=1 // pred_check
      _
    $region23: #{feature_extractor_forward.1} parent=1 // pred_check_branch
      %1185 = sbr.rel (0) target = $region25
    $region24: #{feature_extractor_forward.1} parent=1 // pred_region
      _
    $region25: #{feature_extractor_forward.1} parent=1 // pred_fallthru
      _
    // Predicated region
    $region26: #{feature_extractor_forward.1} parent=1 // pred_check
      _
    $region27: #{feature_extractor_forward.1} parent=1 // pred_check_branch
      %1187 = sbr.rel (0) target = $region29
    $region28: #{feature_extractor_forward.1} parent=1 // pred_region
      _
    $region29: #{feature_extractor_forward.1} parent=1 // pred_fallthru
      _
    // Predicated region
    $region30: #{feature_extractor_forward.1} parent=1 // pred_check
      _
    $region31: #{feature_extractor_forward.1} parent=1 // pred_check_branch
      %1189 = sbr.rel (0) target = $region33
    $region32: #{feature_extractor_forward.1} parent=1 // pred_region
      %s1191 = ssub.s32 32, 32
      %1192 = vsyncadd [#allocation3], %s1191
      %s1194 = sshll.u32 [#allocation2], 4
      %s1195 = int_to_ptr.vmem [resolvable:$true] %s1194
      %1197 = dma.vmem_to_hbm [thread:$0]  %s1195, 32, %s7, [#allocation3]
    $region33: #{feature_extractor_forward.1} parent=1 // pred_fallthru
      _
    // Predicated region
    $region34: #{feature_extractor_forward.1} parent=1 // pred_check
      _
    $region35: #{feature_extractor_forward.1} parent=1 // pred_check_branch
      %1199 = sbr.rel (0) target = $region37
    $region36: #{feature_extractor_forward.1} parent=1 // pred_region
      %s1201 = ssub.s32 32, 32
      %1202 = vsyncadd [#allocation5], %s1201
      %s1204 = sshll.u32 [#allocation4], 4
      %s1205 = int_to_ptr.vmem [resolvable:$true] %s1204
      %1207 = dma.vmem_to_hbm [thread:$0]  %s1205, 32, %s8, [#allocation5]
    $region37: #{feature_extractor_forward.1} parent=1 // pred_fallthru
      _
    // Predicated region
    $region38: #{feature_extractor_forward.1} parent=1 // pred_check
      _
    $region39: #{feature_extractor_forward.1} parent=1 // pred_check_branch
      %1209 = sbr.rel (0) target = $region41
    $region40: #{feature_extractor_forward.1} parent=1 // pred_region
      _
    $region41: #{feature_extractor_forward.1} parent=1 // pred_fallthru
      _
    // Predicated region
    $region42: #{feature_extractor_forward.1} parent=1 // pred_check
      _
    $region43: #{feature_extractor_forward.1} parent=1 // pred_check_branch
      %1211 = sbr.rel (0) target = $region45
    $region44: #{feature_extractor_forward.1} parent=1 // pred_region
      _
    $region45: #{feature_extractor_forward.1} parent=1 // pred_fallthru
      _
    // Predicated region
    $region46: #{feature_extractor_forward.1} parent=1 // pred_check
      _
    $region47: #{feature_extractor_forward.1} parent=1 // pred_check_branch
      %1213 = sbr.rel (0) target = $region49
    $region48: #{feature_extractor_forward.1} parent=1 // pred_region
      %1214 = dma.done [#allocation3], 32
    $region49: #{feature_extractor_forward.1} parent=1 // pred_fallthru
      _
    // Predicated region
    $region50: #{feature_extractor_forward.1} parent=1 // pred_check
      _
    $region51: #{feature_extractor_forward.1} parent=1 // pred_check_branch
      %1216 = sbr.rel (0) target = $region53
    $region52: #{feature_extractor_forward.1} parent=1 // pred_region
      %1217 = dma.done [#allocation5], 32
    $region53: #{feature_extractor_forward.1} parent=1 // pred_fallthru
      _
    %1218 = vsyncpa [#allocation3], 1
    %1219 = vsyncpa [#allocation5], 1

</llo_original>
